<compile_context>
chip_gen: v6e
topology: v6e:2x2x1
jax: 0.10.0
libtpu: 0.0.40
codegen_flags: <defaults>
</compile_context>

<pallas_src>
import jax
import jax.numpy as jnp
from jax import lax
from jax.experimental import pallas as pl
from jax.experimental.pallas import tpu as pltpu


def _round_up(x, m):
    return (x + m - 1) // m * m


def conv1d_kernel(w_ref, xm_ref, xh_ref, o_ref):
    # One (batch n, lane-tile j) grid step.
    #   w_ref : (K, C_out, C_in)  tap-major weight, resident across the grid
    #   xm_ref: (1, C_in, TL)     main input tile  x[n, :, j*TL : j*TL+TL]
    #   xh_ref: (1, C_in, 128)    halo: head of the next tile (clamped at end)
    #   o_ref : (1, C_out, TL)    lane-dense output tile (TL multiple of 128)
    K, C_out, C_in = w_ref.shape
    TL = xm_ref.shape[-1]

    xm = xm_ref[0]                                    # (C_in, TL)
    acc = jnp.dot(w_ref[0], xm, preferred_element_type=jnp.float32)

    if K > 1:
        xh = xh_ref[0]                                # (C_in, 128)
        lane = lax.broadcasted_iota(jnp.int32, (C_in, TL), 1)
        for k in range(1, K):
            # shifted_k[:, t] = x[n, :, j*TL + t + k]
            xk = pltpu.roll(xm, shift=TL - k, axis=1)
            for i in range(k):
                col = jnp.broadcast_to(xh[:, i:i + 1], (C_in, TL))
                xk = jnp.where(lane == TL - k + i, col, xk)
            acc = acc + jnp.dot(w_ref[k], xk,
                                preferred_element_type=jnp.float32)

    o_ref[0] = acc.astype(o_ref.dtype)


def conv1d_pallas(x, w, *, tile_l=None):
    """PyTorch F.conv1d semantics (cross-correlation, stride 1, VALID, no bias)."""
    N, C_in, L = x.shape
    C_out, C_in_w, K = w.shape
    assert C_in == C_in_w, "input channel mismatch"
    L_out = L - K + 1
    assert L_out > 0

    # Tap-major weight so the kernel slices taps on the (free) leading axis.
    w_t = jnp.transpose(w, (2, 0, 1))                 # (K, C_out, C_in)

    # Lane-tile size: as large as practical (per-step VMEM footprint is tiny,
    # < 1 MiB double-buffered even at TL=8192); keep >= 2 grid steps when
    # N == 1 so both v7x TensorCores get work.
    if tile_l is not None:
        assert tile_l % 128 == 0
        TL = tile_l
    else:
        L_out_ceil = _round_up(L_out, 128)
        TL = min(8192, L_out_ceil)
        if N == 1 and L_out_ceil > 128:
            half_blocks = (L_out_ceil // 128 + 1) // 2
            TL = min(TL, half_blocks * 128)
    n_lt = pl.cdiv(L_out, TL)
    n_xb = pl.cdiv(L, 128)      # number of 128-wide blocks along x's L axis

    def halo_map(n, j):
        # First 128 lanes of the next main tile; clamped to stay in bounds
        # (when clamped, the halo is only consumed by masked output lanes).
        return (n, 0, jnp.minimum((j + 1) * (TL // 128), n_xb - 1))

    itemsize = jnp.dtype(x.dtype).itemsize
    cost = pl.CostEstimate(
        flops=2 * N * C_out * C_in * K * L_out,
        transcendentals=0,
        bytes_accessed=(x.size + w.size + N * C_out * L_out) * itemsize,
    )

    return pl.pallas_call(
        conv1d_kernel,
        out_shape=jax.ShapeDtypeStruct((N, C_out, L_out), x.dtype),
        grid_spec=pltpu.PrefetchScalarGridSpec(
            num_scalar_prefetch=0,
            grid=(N, n_lt),
            in_specs=[
                pl.BlockSpec((K, C_out, C_in), lambda n, j: (0, 0, 0)),
                pl.BlockSpec((1, C_in, TL), lambda n, j: (n, 0, j)),
                pl.BlockSpec((1, C_in, 128), halo_map),
            ],
            out_specs=pl.BlockSpec((1, C_out, TL), lambda n, j: (n, 0, j)),
        ),
        compiler_params=pltpu.CompilerParams(
            dimension_semantics=("parallel", "parallel"),
        ),
        cost_estimate=cost,
    )(w_t, x, x)


if __name__ == "__main__":
    key = jax.random.PRNGKey(0)
    kx, kw, kx2 = jax.random.split(key, 3)

    # Small shapes consistent with the module's forward pass (C_in must be 3
    # to match the (10, 3, 2) weight).
    N, C_in, L = 2, 3, 16
    C_out, K = 10, 2

    x1 = jax.random.normal(kx, (N, C_in, L), dtype=jnp.float32)
    # Deterministic stand-in for torch.randn(10, 3, 2) (synthetic weights).
    w = jax.random.normal(kw, (C_out, C_in, K), dtype=jnp.float32)

    y = jax.block_until_ready(conv1d_pallas(x1, w))
    y_ref = lax.conv_general_dilated(
        x1, w, window_strides=(1,), padding="VALID",
        dimension_numbers=("NCH", "OIH", "NCH"),
    )
    assert y.shape == (N, C_out, L - K + 1)
    assert jnp.allclose(y, y_ref, atol=1e-5, rtol=1e-5)

    # Second small check: force TL=128 so the grid has multiple L tiles and the
    # cross-tile halo path (tap crossing a tile boundary) is exercised.
    L2 = 300
    x2 = jax.random.normal(kx2, (1, C_in, L2), dtype=jnp.float32)
    y2 = jax.block_until_ready(conv1d_pallas(x2, w, tile_l=128))
    y2_ref = lax.conv_general_dilated(
        x2, w, window_strides=(1,), padding="VALID",
        dimension_numbers=("NCH", "OIH", "NCH"),
    )
    assert y2.shape == (1, C_out, L2 - K + 1)
    assert jnp.allclose(y2, y2_ref, atol=1e-5, rtol=1e-5)

    print("KERNEL_OK")
</pallas_src>

<mosaic_0001>
module attributes {stable_mosaic.version = 11 : i64} {
  func.func @conv1d_kernel(%arg0: i32, %arg1: i32, %arg2: memref<2x10x3xf32, #tpu.memory_space<vmem>>, %arg3: memref<1x3x128xf32, #tpu.memory_space<vmem>>, %arg4: memref<1x3x128xf32, #tpu.memory_space<vmem>>, %arg5: memref<1x10x128xf32, #tpu.memory_space<vmem>>) attributes {dimension_semantics = [#tpu.dimension_semantics<parallel>, #tpu.dimension_semantics<parallel>], iteration_bounds = array<i64: 2, 1>, scalar_prefetch = 0 : i64, scratch_operands = 0 : i64, tpu.core_type = #tpu.core_type<tc>, window_params = [{pipeline_mode = #tpu.pipeline_mode<synchronous>, transform_indices = @transform_0, window_bounds = array<i64: 2, 10, 3>}, {transform_indices = @transform_1, window_bounds = array<i64: 1, 3, 128>}, {transform_indices = @transform_2, window_bounds = array<i64: 1, 3, 128>}, {transform_indices = @transform_3, window_bounds = array<i64: 1, 10, 128>}]} {
    %c0 = arith.constant 0 : index
    %c0_0 = arith.constant 0 : index
    %c0_1 = arith.constant 0 : index
    %0 = vector.load %arg3[%c0, %c0_0, %c0_1] : memref<1x3x128xf32, #tpu.memory_space<vmem>>, vector<1x3x128xf32>
    %1 = vector.shape_cast %0 : vector<1x3x128xf32> to vector<3x128xf32>
    %c0_2 = arith.constant 0 : index
    %c0_3 = arith.constant 0 : index
    %c0_4 = arith.constant 0 : index
    %2 = vector.load %arg2[%c0_2, %c0_3, %c0_4] : memref<2x10x3xf32, #tpu.memory_space<vmem>>, vector<1x10x3xf32>
    %3 = vector.shape_cast %2 : vector<1x10x3xf32> to vector<10x3xf32>
    %cst = arith.constant dense<0.000000e+00> : vector<10x128xf32>
    %4 = tpu.matmul %3, %1, %cst {dimension_numbers = #tpu.dot_dimension_numbers<[1], [0], [0], [1], [0, 0, 1, 1], [], []>} : vector<10x3xf32>, vector<3x128xf32>, vector<10x128xf32> -> vector<10x128xf32>
    %c0_5 = arith.constant 0 : index
    %c0_6 = arith.constant 0 : index
    %c0_7 = arith.constant 0 : index
    %5 = vector.load %arg4[%c0_5, %c0_6, %c0_7] : memref<1x3x128xf32, #tpu.memory_space<vmem>>, vector<1x3x128xf32>
    %6 = vector.shape_cast %5 : vector<1x3x128xf32> to vector<3x128xf32>
    %7 = tpu.iota {dimensions = array<i32: 1>} : vector<3x128xi32>
    %c127_i32 = arith.constant 127 : i32
    %8 = tpu.dynamic_rotate %1 by %c127_i32 dim 1 : vector<3x128xf32>, i32 -> vector<3x128xf32>
    %9 = vector.extract_strided_slice %6 {offsets = [0, 0], sizes = [3, 1], strides = [1, 1]} : vector<3x128xf32> to vector<3x1xf32>
    %10 = vector.shape_cast %9 : vector<3x1xf32> to vector<3x1xf32>
    %11 = vector.broadcast %10 : vector<3x1xf32> to vector<3x128xf32>
    %c127_i32_8 = arith.constant 127 : i32
    %12 = vector.broadcast %c127_i32_8 : i32 to vector<3x128xi32>
    %13 = arith.cmpi eq, %7, %12 : vector<3x128xi32>
    %14 = arith.select %13, %11, %8 : vector<3x128xi1>, vector<3x128xf32>
    %c1 = arith.constant 1 : index
    %c0_9 = arith.constant 0 : index
    %c0_10 = arith.constant 0 : index
    %15 = vector.load %arg2[%c1, %c0_9, %c0_10] : memref<2x10x3xf32, #tpu.memory_space<vmem>>, vector<1x10x3xf32>
    %16 = vector.shape_cast %15 : vector<1x10x3xf32> to vector<10x3xf32>
    %cst_11 = arith.constant dense<0.000000e+00> : vector<10x128xf32>
    %17 = tpu.matmul %16, %14, %cst_11 {dimension_numbers = #tpu.dot_dimension_numbers<[1], [0], [0], [1], [0, 0, 1, 1], [], []>} : vector<10x3xf32>, vector<3x128xf32>, vector<10x128xf32> -> vector<10x128xf32>
    %18 = arith.addf %4, %17 : vector<10x128xf32>
    %c0_12 = arith.constant 0 : index
    %c0_13 = arith.constant 0 : index
    %c0_14 = arith.constant 0 : index
    %19 = vector.load %arg5[%c0_12, %c0_13, %c0_14] : memref<1x10x128xf32, #tpu.memory_space<vmem>>, vector<1x10x128xf32>
    %20 = vector.shape_cast %19 : vector<1x10x128xf32> to vector<10x128xf32>
    %21 = vector.shape_cast %18 : vector<10x128xf32> to vector<1x10x128xf32>
    tpu.vector_store %arg5[%c0_12, %c0_13, %c0_14], %21 {strides = array<i32>} : memref<1x10x128xf32, #tpu.memory_space<vmem>>, vector<1x10x128xf32>,
    return
  }
  func.func @transform_0(%arg0: i32, %arg1: i32) -> (i32, i32, i32) {
    %c0_i32 = arith.constant 0 : i32
    %c0_i32_0 = arith.constant 0 : i32
    %c0_i32_1 = arith.constant 0 : i32
    %c0_i32_2 = arith.constant 0 : i32
    return %c0_i32, %c0_i32_0, %c0_i32_1 : i32, i32, i32
  }
  func.func @transform_1(%arg0: i32, %arg1: i32) -> (i32, i32, i32) {
    %c0_i32 = arith.constant 0 : i32
    %c0_i32_0 = arith.constant 0 : i32
    return %arg0, %c0_i32, %arg1 : i32, i32, i32
  }
  func.func @transform_2(%arg0: i32, %arg1: i32) -> (i32, i32, i32) {
    %c1_i32 = arith.constant 1 : i32
    %0 = arith.addi %arg1, %c1_i32 : i32
    %c1_i32_0 = arith.constant 1 : i32
    %1 = arith.muli %0, %c1_i32_0 : i32
    %c0_i32 = arith.constant 0 : i32
    %2 = arith.minsi %1, %c0_i32 : i32
    %c0_i32_1 = arith.constant 0 : i32
    %c0_i32_2 = arith.constant 0 : i32
    return %arg0, %c0_i32_1, %2 : i32, i32, i32
  }
  func.func @transform_3(%arg0: i32, %arg1: i32) -> (i32, i32, i32) {
    %c0_i32 = arith.constant 0 : i32
    %c0_i32_0 = arith.constant 0 : i32
    return %arg0, %c0_i32, %arg1 : i32, i32, i32
  }
}

</mosaic_0001>

<llo_original>
// kernel: tpu_custom_call.1
$region0: #{tpu_custom_call.1}
  #allocation0 [shape = 'u32[]', space=smem, size = 0x4, offset = 0x4, fixed_abs, tag = 'smem constant byte address 0x4 - core index']
  #allocation1 [shape = 'u32[144,128]{1,0:T(1,128)}', space=vmem, size = 0x12000, scoped, tag = 'internal scratch']
  %s0 = inlined_call_operand.vmem [shape: f32[2,10,3], index: 0, kind: input, shape index: {}]
  %s1 = inlined_call_operand.vmem [shape: f32[2,3,16], index: 1, kind: input, shape index: {}]
  %s2 = inlined_call_operand.vmem [shape: f32[2,3,16], index: 2, kind: input, shape index: {}]
  %s3 = inlined_call_operand.vmem [shape: f32[2,10,15], index: 3, kind: output, shape index: {}]
  %s4 = sld [smem:[#allocation0]]
  $region45: #{tpu_custom_call.1} parent=0
    _
  %s6 = ssub.s32 1, %s4
  %s7 = scalar_select 0, %s6, %s4
  loop: start=0, step=1, limit=4
  $region2: #{tpu_custom_call.1} parent=0 // loop_pre_header
    _
  $region3: #{tpu_custom_call.1} parent=0 // loop_header
    %s9 = sphi 0, %s13
    %p10 = scmp.ge.s32.totalorder %s9, 4
    %s16 = sphi 0, %s28
    %s17 = sphi 0, %s24
    %s18 = sphi 0, %s16
    %s19 = sphi 0, %s17
    %s20 = sphi 0, %s18
    %s21 = sphi 0, %s19
    %s29 = sphi 0, %s29
    %s31 = sphi 0, %s29
    %s32 = sphi 0, %s31
    %s46 = sphi 0, %s32
    %s54 = sphi 0, %s56
    %s57 = sphi 0, %s54
    %s58 = sphi 0, %s57
    %s74 = sphi 0, %s58
    %s88 = sphi 0, %s90
    %s91 = sphi 0, %s88
    %s92 = sphi 0, %s91
    %s108 = sphi 0, %s92
    %s116 = sphi 0, %s118
    %s119 = sphi 0, %s116
    %s120 = sphi 0, %s119
    %s136 = sphi 0, %s120
  $region4: #{tpu_custom_call.1} parent=0 // loop_header_branch
    %12 = sbr.rel (%p10) target = $region8
  $region5: #{tpu_custom_call.1} parent=0 // loop_body
    %s14 = ssub.s32 %s9, 1
    %s15 = ssub.s32 %s9, 2
    %s22 = sadd.s32 1, %s17
    %p23 = scmp.ge.s32.totalorder %s22, 1
    %s24 = scalar_select %p23, 0, %s22
    %s25 = sadd.s32 1, %s16
    %s26 = scalar_select %p23, %s25, %s16
    %p27 = scmp.ge.s32.totalorder %s26, 2
    %s28 = scalar_select %p27, 0, %s26
    %s30 = sadd.s32 %s29, 1
    %p33 = scmp.eq.s32.totalorder %s9, 1
    %p34 = scmp.ne.s32.totalorder %s29, %s31
    %p35 = scmp.eq.s32.totalorder %s9, 0
    %p36 = por %p34, %p35
    %p37 = scmp.ne.s32.totalorder %s29, %s31
    %p38 = scmp.eq.s32.totalorder %s14, 1
    %p39 = por %p37, %p38
    %p40 = scmp.ne.s32.totalorder %s31, %s32
    %p41 = scmp.eq.s32.totalorder %s14, 0
    %p42 = por %p40, %p41
    %p43 = scmp.ne.s32.totalorder %s31, %s32
    %p44 = scmp.eq.s32.totalorder %s15, 1
    %p45 = por %p43, %p44
    %p47 = scmp.ne.s32.totalorder %s32, %s46
    %p48 = scmp.eq.s32.totalorder %s15, 0
    %p49 = por %p47, %p48
    %s50 = ssub.s32 %s16, %s28
    %s51 = ssub.s32 %s17, %s24
    %s52 = sor.u32 %s50, %s51
    %p53 = scmp.eq.s32.totalorder %s52, 0
    %s55 = sadd.s32 %s54, 1
    %s56 = scalar_select %p53, %s54, %s55
    %p59 = pneg %p53
    %p60 = scmp.eq.s32.totalorder %s9, 1
    %p61 = por %p59, %p60
    %p62 = scmp.ne.s32.totalorder %s54, %s57
    %p63 = scmp.eq.s32.totalorder %s9, 0
    %p64 = por %p62, %p63
    %p65 = scmp.ne.s32.totalorder %s54, %s57
    %p66 = scmp.eq.s32.totalorder %s14, 1
    %p67 = por %p65, %p66
    %p68 = scmp.ne.s32.totalorder %s57, %s58
    %p69 = scmp.eq.s32.totalorder %s14, 0
    %p70 = por %p68, %p69
    %p71 = scmp.ne.s32.totalorder %s57, %s58
    %p72 = scmp.eq.s32.totalorder %s15, 1
    %p73 = por %p71, %p72
    %p75 = scmp.ne.s32.totalorder %s58, %s74
    %p76 = scmp.eq.s32.totalorder %s15, 0
    %p77 = por %p75, %p76
    %s78 = sadd.s32 %s17, 1
    %p79 = scmp.lt.s32.totalorder %s78, 0
    %s80 = scalar_select %p79, %s78, 0
    %s81 = sadd.s32 %s24, 1
    %p82 = scmp.lt.s32.totalorder %s81, 0
    %s83 = scalar_select %p82, %s81, 0
    %s84 = ssub.s32 %s16, %s28
    %s85 = ssub.s32 %s80, %s83
    %s86 = sor.u32 %s84, %s85
    %p87 = scmp.eq.s32.totalorder %s86, 0
    %s89 = sadd.s32 %s88, 1
    %s90 = scalar_select %p87, %s88, %s89
    %p93 = pneg %p87
    %p94 = scmp.eq.s32.totalorder %s9, 1
    %p95 = por %p93, %p94
    %p96 = scmp.ne.s32.totalorder %s88, %s91
    %p97 = scmp.eq.s32.totalorder %s9, 0
    %p98 = por %p96, %p97
    %p99 = scmp.ne.s32.totalorder %s88, %s91
    %p100 = scmp.eq.s32.totalorder %s14, 1
    %p101 = por %p99, %p100
    %p102 = scmp.ne.s32.totalorder %s91, %s92
    %p103 = scmp.eq.s32.totalorder %s14, 0
    %p104 = por %p102, %p103
    %p105 = scmp.ne.s32.totalorder %s91, %s92
    %p106 = scmp.eq.s32.totalorder %s15, 1
    %p107 = por %p105, %p106
    %p109 = scmp.ne.s32.totalorder %s92, %s108
    %p110 = scmp.eq.s32.totalorder %s15, 0
    %p111 = por %p109, %p110
    %s112 = ssub.s32 %s16, %s28
    %s113 = ssub.s32 %s17, %s24
    %s114 = sor.u32 %s112, %s113
    %p115 = scmp.eq.s32.totalorder %s114, 0
    %s117 = sadd.s32 %s116, 1
    %s118 = scalar_select %p115, %s116, %s117
    %p121 = pneg %p115
    %p122 = scmp.eq.s32.totalorder %s9, 1
    %p123 = por %p121, %p122
    %p124 = scmp.ne.s32.totalorder %s116, %s119
    %p125 = scmp.eq.s32.totalorder %s9, 0
    %p126 = por %p124, %p125
    %p127 = scmp.ne.s32.totalorder %s116, %s119
    %p128 = scmp.eq.s32.totalorder %s14, 1
    %p129 = por %p127, %p128
    %p130 = scmp.ne.s32.totalorder %s119, %s120
    %p131 = scmp.eq.s32.totalorder %s14, 0
    %p132 = por %p130, %p131
    %p133 = scmp.ne.s32.totalorder %s119, %s120
    %p134 = scmp.eq.s32.totalorder %s15, 1
    %p135 = por %p133, %p134
    %p137 = scmp.ne.s32.totalorder %s120, %s136
    %p138 = scmp.eq.s32.totalorder %s15, 0
    %p139 = por %p137, %p138
    %p140 = scmp.le.s32.totalorder 1, %s9
    %p141 = scmp.lt.s32.totalorder %s9, 3
    %p142 = pnand %p140, %p141
    %p143 = pneg %p142
    // Predicated region
    $region9: #{tpu_custom_call.1} parent=5 // pred_check
      _
    $region10: #{tpu_custom_call.1} parent=5 // pred_check_branch
      %145 = sbr.rel (%p142) target = $region12
    $region11: #{tpu_custom_call.1} parent=5 // pred_region
      %s146 = ssub.s32 %s9, 1
      // Predicated region
      $region13: #{tpu_custom_call.1} parent=11 // pred_check
        %p147 = pneg %p42
      $region14: #{tpu_custom_call.1} parent=11 // pred_check_branch
        %149 = sbr.rel (%p147) target = $region16
      $region15: #{tpu_custom_call.1} parent=11 // pred_region
        _
      $region16: #{tpu_custom_call.1} parent=11 // pred_fallthru
        _
    $region12: #{tpu_custom_call.1} parent=5 // pred_fallthru
      _
    %p150 = scmp.lt.s32.totalorder %s9, 2
    // Predicated region
    $region17: #{tpu_custom_call.1} parent=5 // pred_check
      %p151 = pneg %p150
    $region18: #{tpu_custom_call.1} parent=5 // pred_check_branch
      %153 = sbr.rel (%p151) target = $region20
    $region19: #{tpu_custom_call.1} parent=5 // pred_region
      // Predicated region
      $region21: #{tpu_custom_call.1} parent=19 // pred_check
        %p154 = pneg %p64
      $region22: #{tpu_custom_call.1} parent=19 // pred_check_branch
        %156 = sbr.rel (%p154) target = $region24
      $region23: #{tpu_custom_call.1} parent=19 // pred_region
        %p157 = scmp.lt.s32.totalorder %s16, 1
        %s158 = scalar_select %p157, %s16, 1
        %p159 = scmp.lt.s32.totalorder %s17, 0
        %s160 = scalar_select %p159, %s17, 0
        %s161 = sadd.s32 %s160, %s158
        %s162 = smul.addr %s161, 4
        %s163 = scalar_lea.vmem %s1, %s162
      $region24: #{tpu_custom_call.1} parent=19 // pred_fallthru
        _
      // Predicated region
      $region25: #{tpu_custom_call.1} parent=19 // pred_check
        %p164 = pneg %p98
      $region26: #{tpu_custom_call.1} parent=19 // pred_check_branch
        %166 = sbr.rel (%p164) target = $region28
      $region27: #{tpu_custom_call.1} parent=19 // pred_region
        %s167 = sadd.s32 %s17, 1
        %p168 = scmp.lt.s32.totalorder %s167, 0
        %s169 = scalar_select %p168, %s167, 0
        %p170 = scmp.lt.s32.totalorder %s16, 1
        %s171 = scalar_select %p170, %s16, 1
        %p172 = scmp.lt.s32.totalorder %s169, 0
        %s173 = scalar_select %p172, %s169, 0
        %s174 = sadd.s32 %s173, %s171
        %s175 = smul.addr %s174, 4
        %s176 = scalar_lea.vmem %s2, %s175
        %s177 = sadd.s32 %s17, 1
        %p178 = scmp.lt.s32.totalorder %s177, 0
        %s179 = scalar_select %p178, %s177, 0
      $region28: #{tpu_custom_call.1} parent=19 // pred_fallthru
        _
    $region20: #{tpu_custom_call.1} parent=5 // pred_fallthru
      _
    %p180 = scmp.le.s32.totalorder 1, %s9
    %p181 = scmp.lt.s32.totalorder %s9, 3
    %p182 = pnand %p180, %p181
    %p183 = pneg %p182
    // Predicated region
    $region29: #{tpu_custom_call.1} parent=5 // pred_check
      _
    $region30: #{tpu_custom_call.1} parent=5 // pred_check_branch
      %185 = sbr.rel (%p182) target = $region32
    $region31: #{tpu_custom_call.1} parent=5 // pred_region
      %s186 = ssub.s32 %s9, 1
      %p187 = pneg %p42
      %p188 = pneg %p39
      %p189 = scmp.lt.s32.totalorder %s18, 1
      %s190 = scalar_select %p189, %s18, 1
      %p191 = scmp.lt.s32.totalorder %s19, 0
      %s192 = scalar_select %p191, %s19, 0
      %s193 = sadd.s32 %s192, %s190
      %s194 = smul.addr %s193, 4
      %s195 = scalar_lea.vmem %s1, %s194
      %p196 = pneg %p70
      %p197 = pneg %p67
      %s198 = sadd.s32 %s19, 1
      %p199 = scmp.lt.s32.totalorder %s198, 0
      %s200 = scalar_select %p199, %s198, 0
      %p201 = scmp.lt.s32.totalorder %s18, 1
      %s202 = scalar_select %p201, %s18, 1
      %p203 = scmp.lt.s32.totalorder %s200, 0
      %s204 = scalar_select %p203, %s200, 0
      %s205 = sadd.s32 %s204, %s202
      %s206 = smul.addr %s205, 4
      %s207 = scalar_lea.vmem %s2, %s206
      %p208 = pneg %p104
      %p209 = pneg %p101
      %p210 = pneg %p132
      %p211 = pneg %p129
      %p212 = scmp.lt.s32.totalorder %s18, 1
      %s213 = scalar_select %p212, %s18, 1
      %p214 = scmp.lt.s32.totalorder %s19, 0
      %s215 = scalar_select %p214, %s19, 0
      %s216 = smul.addr %s213, 2
      %s217 = sadd.s32 %s215, %s216
      %s218 = smul.addr %s217, 8
      %s219 = scalar_lea.vmem %s3, %s218
      %p220 = scmp.lt.s32.totalorder %s18, 1
      %s221 = scalar_select %p220, %s18, 1
      %p222 = scmp.lt.s32.totalorder %s19, 0
      %s223 = scalar_select %p222, %s19, 0
      %s224 = sadd.s32 %s223, %s221
      %s225 = smul.addr %s224, 4
      %s226 = scalar_lea.vmem %s1, %s225
      %s227 = sadd.s32 %s19, 1
      %p228 = scmp.lt.s32.totalorder %s227, 0
      %s229 = scalar_select %p228, %s227, 0
      %p230 = scmp.lt.s32.totalorder %s18, 1
      %s231 = scalar_select %p230, %s18, 1
      %p232 = scmp.lt.s32.totalorder %s229, 0
      %s233 = scalar_select %p232, %s229, 0
      %s234 = sadd.s32 %s233, %s231
      %s235 = smul.addr %s234, 4
      %s236 = scalar_lea.vmem %s2, %s235
      %s237 = sadd.s32 %s19, 1
      %p238 = scmp.lt.s32.totalorder %s237, 0
      %s239 = scalar_select %p238, %s237, 0
      %p240 = scmp.lt.s32.totalorder %s18, 1
      %s241 = scalar_select %p240, %s18, 1
      %p242 = scmp.lt.s32.totalorder %s19, 0
      %s243 = scalar_select %p242, %s19, 0
      %s244 = smul.addr %s241, 2
      %s245 = sadd.s32 %s243, %s244
      %s246 = smul.addr %s245, 8
      %s247 = scalar_lea.vmem %s3, %s246
      %v248 = vld [vmem:[%s226] sm:$0x7]
      %v249 = vld [vmem:[%s0] sm:$0xff]
      %v250 = vld [vmem:[%s0 + $0x8] sm:$0x3]
      %v251 = vld [vmem:[%s236] sm:$0x7]
      %v252 = vlaneseq
      %v253 = vand.u32 %v252, 127
      %254 = vrot.lane.b32.xlu0 %v248, 127
      %v255 = vpop.permute.xlu0 %254
      %257 = vset.pattern.permute.xlu0 0
      %258 = vperm.xlu0 %257, %v251
      %v259 = vpop.permute.xlu0 %258
      %vm261 = vcmp.eq.s32.totalorder %v253, 127
      %v262 = vsel %vm261, %v259, %v255
      %s263 = scalar_lea.vmem %s0, 16
      %v264 = vld [vmem:[%s263] sm:$0xff]
      %v265 = vld [vmem:[%s263 + $0x8] sm:$0x3]
      %vm266 = vcmask 23552
      %v268 = vsel %vm266, %v264, 0
      %v271 = vsel %vm266, %v265, 0
      %vm273 = vcmask 1042432
      %v275 = vsel %vm273, %v262, 0
      %277 = vmatprep.subr.mxu0 0.0
      %278 = vmatpush1.msra.mxu0 0.0
      %279 = vmatprep.subr.mxu0 0.0
      %280 = vmatpush1.msra.mxu0 0.0
      %281 = vmatprep.subr.mxu0 0.0
      %282 = vmatpush1.msra.mxu0 0.0
      %283 = vmatprep.subr.mxu0 0.0
      %284 = vmatpush1.msra.mxu0 0.0
      %285 = vmatprep.subr.mxu0 0.0
      %286 = vmatpush1.msra.mxu0 0.0
      %287 = vmatprep.subr.mxu0 0.0
      %288 = vmatpush1.msra.mxu0 0.0
      %289 = vmatprep.subr.mxu0 0.0
      %290 = vmatpush1.msra.mxu0 0.0
      %291 = vmatprep.subr.mxu0 0.0
      %292 = vmatpush1.msra.mxu0 0.0
      %293 = vmatprep.subr.mxu0 0.0
      %294 = vmatpush1.msra.mxu0 0.0
      %295 = vmatprep.subr.mxu0 0.0
      %296 = vmatpush1.msra.mxu0 0.0
      %297 = vmatprep.subr.mxu0 0.0
      %298 = vmatpush1.msra.mxu0 0.0
      %299 = vmatprep.subr.mxu0 0.0
      %300 = vmatpush1.msra.mxu0 0.0
      %301 = vmatprep.subr.mxu0 0.0
      %302 = vmatpush1.msra.mxu0 0.0
      %303 = vmatprep.subr.mxu0 0.0
      %304 = vmatpush1.msra.mxu0 0.0
      %305 = vmatprep.subr.mxu0 0.0
      %306 = vmatpush1.msra.mxu0 0.0
      %307 = vmatprep.subr.mxu0 0.0
      %308 = vmatpush1.msra.mxu0 %v275
      %309 = vmatprep.subr.mxu0 0.0
      %310 = vmatpush2.msra.mxu0 0.0
      %311 = vmatprep.subr.mxu0 0.0
      %312 = vmatpush2.msra.mxu0 0.0
      %313 = vmatprep.subr.mxu0 0.0
      %314 = vmatpush2.msra.mxu0 0.0
      %315 = vmatprep.subr.mxu0 0.0
      %316 = vmatpush2.msra.mxu0 0.0
      %317 = vmatprep.subr.mxu0 0.0
      %318 = vmatpush2.msra.mxu0 0.0
      %319 = vmatprep.subr.mxu0 0.0
      %320 = vmatpush2.msra.mxu0 0.0
      %321 = vmatprep.subr.mxu0 0.0
      %322 = vmatpush2.msra.mxu0 0.0
      %323 = vmatprep.subr.mxu0 0.0
      %324 = vmatpush2.msra.mxu0 0.0
      %325 = vmatprep.subr.mxu0 0.0
      %326 = vmatpush2.msra.mxu0 0.0
      %327 = vmatprep.subr.mxu0 0.0
      %328 = vmatpush2.msra.mxu0 0.0
      %329 = vmatprep.subr.mxu0 0.0
      %330 = vmatpush2.msra.mxu0 0.0
      %331 = vmatprep.subr.mxu0 0.0
      %332 = vmatpush2.msra.mxu0 0.0
      %333 = vmatprep.subr.mxu0 0.0
      %334 = vmatpush2.msra.mxu0 0.0
      %335 = vmatprep.subr.mxu0 0.0
      %336 = vmatpush2.msra.mxu0 0.0
      %337 = vmatprep.subr.mxu0 0.0
      %338 = vmatpush2.msra.mxu0 0.0
      %339 = vmatprep.subr.mxu0 0.0
      %340 = vmatpush2.msra.mxu0 0.0
      %341 = vmatprep.mubr.f32.mxu0 0.0
      %342 = vmatmul.mubr.f32.gmra.mxu0 %v268
      %v343 = vpop.f32.mrf.mxu0
      %v344 = vadd.f32 0.0, %v343
      %v345 = vpop.f32.mrf.mxu0
      %346 = vmatprep.mubr.f32.mxu0 0.0
      %347 = vmatmul.mubr.f32.gmra.mxu0 %v271
      %v348 = vpop.f32.mrf.mxu0
      %v349 = vadd.f32 0.0, %v348
      %v350 = vpop.f32.mrf.mxu0
      %351 = vdwg.mxu0
      %v353 = vsel %vm266, %v249, 0
      %v356 = vsel %vm266, %v250, 0
      %v359 = vsel %vm273, %v248, 0
      %361 = vmatprep.subr.mxu0 0.0
      %362 = vmatpush1.msra.mxu0 0.0
      %363 = vmatprep.subr.mxu0 0.0
      %364 = vmatpush1.msra.mxu0 0.0
      %365 = vmatprep.subr.mxu0 0.0
      %366 = vmatpush1.msra.mxu0 0.0
      %367 = vmatprep.subr.mxu0 0.0
      %368 = vmatpush1.msra.mxu0 0.0
      %369 = vmatprep.subr.mxu0 0.0
      %370 = vmatpush1.msra.mxu0 0.0
      %371 = vmatprep.subr.mxu0 0.0
      %372 = vmatpush1.msra.mxu0 0.0
      %373 = vmatprep.subr.mxu0 0.0
      %374 = vmatpush1.msra.mxu0 0.0
      %375 = vmatprep.subr.mxu0 0.0
      %376 = vmatpush1.msra.mxu0 0.0
      %377 = vmatprep.subr.mxu0 0.0
      %378 = vmatpush1.msra.mxu0 0.0
      %379 = vmatprep.subr.mxu0 0.0
      %380 = vmatpush1.msra.mxu0 0.0
      %381 = vmatprep.subr.mxu0 0.0
      %382 = vmatpush1.msra.mxu0 0.0
      %383 = vmatprep.subr.mxu0 0.0
      %384 = vmatpush1.msra.mxu0 0.0
      %385 = vmatprep.subr.mxu0 0.0
      %386 = vmatpush1.msra.mxu0 0.0
      %387 = vmatprep.subr.mxu0 0.0
      %388 = vmatpush1.msra.mxu0 0.0
      %389 = vmatprep.subr.mxu0 0.0
      %390 = vmatpush1.msra.mxu0 0.0
      %391 = vmatprep.subr.mxu0 0.0
      %392 = vmatpush1.msra.mxu0 %v359
      %393 = vmatprep.subr.mxu0 0.0
      %394 = vmatpush2.msra.mxu0 0.0
      %395 = vmatprep.subr.mxu0 0.0
      %396 = vmatpush2.msra.mxu0 0.0
      %397 = vmatprep.subr.mxu0 0.0
      %398 = vmatpush2.msra.mxu0 0.0
      %399 = vmatprep.subr.mxu0 0.0
      %400 = vmatpush2.msra.mxu0 0.0
      %401 = vmatprep.subr.mxu0 0.0
      %402 = vmatpush2.msra.mxu0 0.0
      %403 = vmatprep.subr.mxu0 0.0
      %404 = vmatpush2.msra.mxu0 0.0
      %405 = vmatprep.subr.mxu0 0.0
      %406 = vmatpush2.msra.mxu0 0.0
      %407 = vmatprep.subr.mxu0 0.0
      %408 = vmatpush2.msra.mxu0 0.0
      %409 = vmatprep.subr.mxu0 0.0
      %410 = vmatpush2.msra.mxu0 0.0
      %411 = vmatprep.subr.mxu0 0.0
      %412 = vmatpush2.msra.mxu0 0.0
      %413 = vmatprep.subr.mxu0 0.0
      %414 = vmatpush2.msra.mxu0 0.0
      %415 = vmatprep.subr.mxu0 0.0
      %416 = vmatpush2.msra.mxu0 0.0
      %417 = vmatprep.subr.mxu0 0.0
      %418 = vmatpush2.msra.mxu0 0.0
      %419 = vmatprep.subr.mxu0 0.0
      %420 = vmatpush2.msra.mxu0 0.0
      %421 = vmatprep.subr.mxu0 0.0
      %422 = vmatpush2.msra.mxu0 0.0
      %423 = vmatprep.subr.mxu0 0.0
      %424 = vmatpush2.msra.mxu0 0.0
      %425 = vmatprep.mubr.f32.mxu0 0.0
      %426 = vmatmul.mubr.f32.gmra.mxu0 %v353
      %v427 = vpop.f32.mrf.mxu0
      %v428 = vadd.f32 %v344, %v427
      %v429 = vpop.f32.mrf.mxu0
      %430 = vmatprep.mubr.f32.mxu0 0.0
      %431 = vmatmul.mubr.f32.gmra.mxu0 %v356
      %v432 = vpop.f32.mrf.mxu0
      %v433 = vadd.f32 %v349, %v432
      %v434 = vpop.f32.mrf.mxu0
      %435 = vdwg.mxu0
      %436 = vst [vmem:[%s247] sm:$0xff] %v428
      %437 = vst [vmem:[%s247 + $0x8] sm:$0x3] %v433
      %p438 = scmp.lt.s32.totalorder %s18, 1
      %s439 = scalar_select %p438, %s18, 1
      %p440 = scmp.lt.s32.totalorder %s19, 0
      %s441 = scalar_select %p440, %s19, 0
      %s442 = smul.addr %s439, 2
      %s443 = sadd.s32 %s441, %s442
      %s444 = smul.addr %s443, 8
      %s445 = scalar_lea.vmem %s3, %s444
      // Predicated region
      $region33: #{tpu_custom_call.1} parent=31 // pred_check
        %p446 = pneg %p129
      $region34: #{tpu_custom_call.1} parent=31 // pred_check_branch
        %448 = sbr.rel (%p446) target = $region36
      $region35: #{tpu_custom_call.1} parent=31 // pred_region
        _
      $region36: #{tpu_custom_call.1} parent=31 // pred_fallthru
        _
    $region32: #{tpu_custom_call.1} parent=5 // pred_fallthru
      _
    %p449 = scmp.le.s32.totalorder 2, %s9
    // Predicated region
    $region37: #{tpu_custom_call.1} parent=5 // pred_check
      %p450 = pneg %p449
    $region38: #{tpu_custom_call.1} parent=5 // pred_check_branch
      %452 = sbr.rel (%p450) target = $region40
    $region39: #{tpu_custom_call.1} parent=5 // pred_region
      %s453 = ssub.s32 %s9, 2
      // Predicated region
      $region41: #{tpu_custom_call.1} parent=39 // pred_check
        %p454 = pneg %p135
      $region42: #{tpu_custom_call.1} parent=39 // pred_check_branch
        %456 = sbr.rel (%p454) target = $region44
      $region43: #{tpu_custom_call.1} parent=39 // pred_region
        %p457 = scmp.lt.s32.totalorder %s20, 1
        %s458 = scalar_select %p457, %s20, 1
        %p459 = scmp.lt.s32.totalorder %s21, 0
        %s460 = scalar_select %p459, %s21, 0
        %s461 = smul.addr %s458, 2
        %s462 = sadd.s32 %s460, %s461
        %s463 = smul.addr %s462, 8
        %s464 = scalar_lea.vmem %s3, %s463
      $region44: #{tpu_custom_call.1} parent=39 // pred_fallthru
        _
    $region40: #{tpu_custom_call.1} parent=5 // pred_fallthru
      _
  $region6: #{tpu_custom_call.1} parent=0 // loop_footer
    %s13 = sadd.s32 1, %s9
  $region7: #{tpu_custom_call.1} parent=0 // loop_footer_branch
    %8 = sbr.rel target = $region3
  $region8: #{tpu_custom_call.1} parent=0 // loop_exit
    _

</llo_original>
